<compile_context>
chip_gen: v7x
topology: tpu7x:2x2x1
jax: 0.10.0
libtpu: 0.0.40
codegen_flags: <defaults>
</compile_context>

<pallas_src>
import numpy as np
import jax
import jax.numpy as jnp
from jax.experimental import pallas as pl
from jax.experimental.pallas import tpu as pltpu


def _pick_hw_tile(hw, max_tile=512):
    """Largest multiple of 128 that divides hw and is <= max_tile (else hw)."""
    best = None
    t = 128
    while t <= min(hw, max_tile):
        if hw % t == 0:
            best = t
        t += 128
    return best if best is not None else hw


def _make_synthesis_input_kernel(W_sz, H_sz, sx, sy, tile_hw, matmul_dtype):
    inv_w = np.float32(1.0 / W_sz)
    inv_h = np.float32(1.0 / H_sz)
    w_f = np.float32(W_sz)

    def kernel(p_ref, wm_ref, out_ref):
        # p_ref:   [C, 4]        columns: 2*pi*fx, 2*pi*fy, 2*pi*phase, amplitude
        # wm_ref:  [C, C]        weight / sqrt(C)
        # out_ref: [C, TILE_HW]  channels on sublanes, pixels on lanes (lane dense)
        t = pl.program_id(1)

        p = p_ref[...]
        fx = p[:, 0:1]                        # [C, 1]
        fy = p[:, 1:2]
        ph = p[:, 2:3]
        am = p[:, 3:4]

        # Flat pixel index for this tile (row-major: y outer, x inner).
        idx = (jax.lax.broadcasted_iota(jnp.int32, (1, tile_hw), 1)
               + t * tile_hw).astype(jnp.float32)           # [1, TILE]

        # Exact float decomposition idx = y*W + x (with off-by-one correction;
        # avoids relying on vectorized integer div/rem).
        yi = jnp.floor(idx * inv_w)
        xi = idx - yi * w_f
        hi = xi >= w_f
        lo = xi < 0.0
        yi = jnp.where(hi, yi + 1.0, jnp.where(lo, yi - 1.0, yi))
        xi = jnp.where(hi, xi - w_f, jnp.where(lo, xi + w_f, xi))

        # affine_grid(theta, [1,1,H,W], align_corners=False) coordinates.
        gx = ((2.0 * xi + 1.0) * inv_w - 1.0) * sx           # [1, TILE]
        gy = ((2.0 * yi + 1.0) * inv_h - 1.0) * sy           # [1, TILE]

        # K=2 contraction as VPU broadcast FMAs (2*pi already folded in).
        arg = fx * gx + fy * gy + ph                         # [C, TILE]
        feat = jnp.sin(arg) * am                             # [C, TILE]

        # Channel mix on the MXU: [C, C] @ [C, TILE] -> [C, TILE].
        wm = wm_ref[...]
        if matmul_dtype != jnp.float32:
            wm = wm.astype(matmul_dtype)
            feat = feat.astype(matmul_dtype)
        out_ref[...] = jnp.dot(wm, feat,
                               preferred_element_type=jnp.float32
                               ).astype(out_ref.dtype)

    return kernel


def init_synthesis_input_params(key, w_dim, channels, bandwidth):
    k1, k2, k3 = jax.random.split(key, 3)
    # freqs = randn([C, 2]); normalize by radii * exp(radii^2)^0.25; * bandwidth
    freqs = jax.random.normal(k1, (channels, 2), dtype=jnp.float32)
    radii = jnp.sqrt(jnp.sum(jnp.square(freqs), axis=1, keepdims=True))
    freqs = freqs / (radii * jnp.power(jnp.exp(jnp.square(radii)), 0.25))
    freqs = freqs * bandwidth
    # phases = rand([C]) - 0.5
    phases = jax.random.uniform(k2, (channels,), dtype=jnp.float32) - 0.5
    # channel-mixing weight = randn([C, C])
    weight = jax.random.normal(k3, (channels, channels), dtype=jnp.float32)
    # affine FC: weight_init=0 -> zeros; bias_init=[1,0,0,0]
    affine_w = jnp.zeros((4, w_dim), dtype=jnp.float32)
    affine_b = jnp.array([1.0, 0.0, 0.0, 0.0], dtype=jnp.float32)
    return dict(freqs=freqs, phases=phases, weight=weight,
                affine_w=affine_w, affine_b=affine_b)


def synthesis_input_forward(w, params, size, sampling_rate, bandwidth,
                            max_hw_tile=512, matmul_dtype=jnp.float32):
    """Mirrors SynthesisInput.forward(w) with transform=None, factor=1.

    matmul_dtype=jnp.bfloat16 may be used on v6e/v7x for large-C configs
    (channel-mix matmul only; accumulation stays f32).
    """
    B, w_dim = w.shape
    C = params["weight"].shape[0]
    W_sz, H_sz = int(size[0]), int(size[1])
    HW = H_sz * W_sz
    TILE = _pick_hw_tile(HW, max_hw_tile)
    n_tiles = HW // TILE

    # ---- affine FC (FullyConnectedLayer, 'linear', tiny -> JAX glue) ----
    weight_gain = 1.0 / np.sqrt(w_dim)
    t = w @ (params["affine_w"].T * weight_gain) + params["affine_b"][None, :]  # [B, 4]
    t = t / jnp.linalg.norm(t[:, :2], axis=1, keepdims=True)

    # ---- compose 3x3 transforms (tiny -> JAX glue) ----
    eye3 = jnp.eye(3, dtype=jnp.float32)
    m_r = jnp.tile(eye3[None], (B, 1, 1))
    m_r = m_r.at[:, 0, 0].set(t[:, 0])
    m_r = m_r.at[:, 0, 1].set(-t[:, 1])
    m_r = m_r.at[:, 1, 0].set(t[:, 1])
    m_r = m_r.at[:, 1, 1].set(t[:, 0])
    m_t = jnp.tile(eye3[None], (B, 1, 1))
    m_t = m_t.at[:, 0, 2].set(-t[:, 2])
    m_t = m_t.at[:, 1, 2].set(-t[:, 3])
    transform = eye3[None]                                  # registered buffer (identity)
    transforms = m_r @ m_t @ transform                      # [B, 3, 3]

    freqs0 = params["freqs"][None]                          # [1, C, 2]
    phases0 = params["phases"][None]                        # [1, C]
    phases = phases0 + (freqs0 @ transforms[:, :2, 2:])[..., 0]    # [B, C]
    freqs = freqs0 @ transforms[:, :2, :2]                  # [B, C, 2]
    amps = jnp.clip(
        1.0 - (jnp.linalg.norm(freqs, axis=2) - bandwidth)
        / (sampling_rate / 2.0 - bandwidth), 0.0, 1.0)      # [B, C]

    # ---- pack per-batch per-channel params: [B, C, 4] (2*pi folded in) ----
    two_pi = np.float32(2.0 * np.pi)
    packed = jnp.concatenate(
        [freqs * two_pi,                      # 2*pi*fx, 2*pi*fy
         (phases * two_pi)[..., None],        # 2*pi*phase
         amps[..., None]],                    # amplitude
        axis=-1).astype(jnp.float32)          # [B, C, 4]

    wm = (params["weight"] / np.sqrt(C)).astype(jnp.float32)   # [C, C]

    sx = float(0.5 * W_sz / sampling_rate)
    sy = float(0.5 * H_sz / sampling_rate)
    kernel = _make_synthesis_input_kernel(W_sz, H_sz, sx, sy, TILE, matmul_dtype)

    out = pl.pallas_call(
        kernel,
        out_shape=jax.ShapeDtypeStruct((B, C, HW), jnp.float32),
        grid_spec=pltpu.PrefetchScalarGridSpec(
            num_scalar_prefetch=0,
            grid=(B, n_tiles),
            in_specs=[
                pl.BlockSpec((None, C, 4), lambda b, t: (b, 0, 0)),   # packed params
                pl.BlockSpec((C, C), lambda b, t: (0, 0)),            # weight/sqrt(C) (shared)
            ],
            out_specs=pl.BlockSpec((None, C, TILE), lambda b, t: (b, 0, t)),
        ),
        compiler_params=pltpu.CompilerParams(
            dimension_semantics=("parallel", "parallel")),
    )(packed, wm)

    return out.reshape(B, C, H_sz, W_sz)                    # NCHW, no transpose needed


def _reference_forward(w, params, size, sampling_rate, bandwidth):
    """Pure-JAX reference mirroring the torch forward, for verification."""
    B, w_dim = w.shape
    C = params["weight"].shape[0]
    W_sz, H_sz = int(size[0]), int(size[1])
    weight_gain = 1.0 / np.sqrt(w_dim)
    t = w @ (params["affine_w"].T * weight_gain) + params["affine_b"][None, :]
    t = t / jnp.linalg.norm(t[:, :2], axis=1, keepdims=True)
    eye3 = jnp.eye(3, dtype=jnp.float32)
    m_r = jnp.tile(eye3[None], (B, 1, 1))
    m_r = m_r.at[:, 0, 0].set(t[:, 0]).at[:, 0, 1].set(-t[:, 1])
    m_r = m_r.at[:, 1, 0].set(t[:, 1]).at[:, 1, 1].set(t[:, 0])
    m_t = jnp.tile(eye3[None], (B, 1, 1))
    m_t = m_t.at[:, 0, 2].set(-t[:, 2]).at[:, 1, 2].set(-t[:, 3])
    transforms = m_r @ m_t @ eye3[None]
    freqs0 = params["freqs"][None]
    phases = params["phases"][None] + (freqs0 @ transforms[:, :2, 2:])[..., 0]
    freqs = freqs0 @ transforms[:, :2, :2]
    amps = jnp.clip(1.0 - (jnp.linalg.norm(freqs, axis=2) - bandwidth)
                    / (sampling_rate / 2.0 - bandwidth), 0.0, 1.0)
    sx = 0.5 * W_sz / sampling_rate
    sy = 0.5 * H_sz / sampling_rate
    xs = ((2.0 * jnp.arange(W_sz, dtype=jnp.float32) + 1.0) / W_sz - 1.0) * sx
    ys = ((2.0 * jnp.arange(H_sz, dtype=jnp.float32) + 1.0) / H_sz - 1.0) * sy
    grids = jnp.stack(jnp.broadcast_arrays(xs[None, :], ys[:, None]), axis=-1)  # [H, W, 2]
    x = jnp.einsum('hwd,bcd->bhwc', grids, freqs) + phases[:, None, None, :]
    x = jnp.sin(x * (2.0 * np.pi)) * amps[:, None, None, :]
    x = jnp.einsum('bhwc,dc->bhwd', x, params["weight"] / np.sqrt(C))
    return jnp.transpose(x, (0, 3, 1, 2))


if __name__ == "__main__":
    # Module config (small, consistent with SynthesisInput.__init__)
    w_dim = 32
    channels = 16
    size = 16            # broadcast to [16, 16]
    sampling_rate = 16.0
    bandwidth = 2.0
    margin_size = 2      # unused in forward
    batch = 2

    key = jax.random.PRNGKey(0)
    kp, kw = jax.random.split(key)
    params = init_synthesis_input_params(kp, w_dim, channels, bandwidth)
    w = jax.random.normal(kw, (batch, w_dim), dtype=jnp.float32)

    size2 = np.broadcast_to(np.asarray(size), [2])
    # max_hw_tile=128 -> HW=256 is split into 2 tiles per batch (exercises the
    # (B, HW_tiles) grid and the in-kernel tile-offset coordinate generation).
    out = synthesis_input_forward(w, params, size2, sampling_rate, bandwidth,
                                  max_hw_tile=128)
    out = jax.block_until_ready(out)

    assert out.shape == (batch, channels, int(size2[1]), int(size2[0])), out.shape

    ref = jax.block_until_ready(
        _reference_forward(w, params, size2, sampling_rate, bandwidth))
    np.testing.assert_allclose(np.asarray(out), np.asarray(ref), atol=1e-4, rtol=1e-4)

    print("KERNEL_OK")
</pallas_src>

<mosaic_0001>
module attributes {stable_mosaic.version = 11 : i64} {
  func.func @kernel(%arg0: i32, %arg1: i32, %arg2: memref<1x16x4xf32, #tpu.memory_space<vmem>>, %arg3: memref<16x16xf32, #tpu.memory_space<vmem>>, %arg4: memref<1x16x128xf32, #tpu.memory_space<vmem>>) attributes {dimension_semantics = [#tpu.dimension_semantics<parallel>, #tpu.dimension_semantics<parallel>], iteration_bounds = array<i64: 2, 2>, scalar_prefetch = 0 : i64, scratch_operands = 0 : i64, tpu.core_type = #tpu.core_type<tc>, window_params = [{transform_indices = @transform_0, window_bounds = array<i64: 1, 16, 4>}, {pipeline_mode = #tpu.pipeline_mode<synchronous>, transform_indices = @transform_1, window_bounds = array<i64: 16, 16>}, {transform_indices = @transform_2, window_bounds = array<i64: 1, 16, 128>}]} {
    %c0 = arith.constant 0 : index
    %c0_0 = arith.constant 0 : index
    %c0_1 = arith.constant 0 : index
    %0 = vector.load %arg2[%c0, %c0_0, %c0_1] : memref<1x16x4xf32, #tpu.memory_space<vmem>>, vector<1x16x4xf32>
    %1 = vector.shape_cast %0 : vector<1x16x4xf32> to vector<16x4xf32>
    %2 = vector.extract_strided_slice %1 {offsets = [0, 0], sizes = [16, 1], strides = [1, 1]} : vector<16x4xf32> to vector<16x1xf32>
    %3 = vector.extract_strided_slice %1 {offsets = [0, 1], sizes = [16, 1], strides = [1, 1]} : vector<16x4xf32> to vector<16x1xf32>
    %4 = vector.extract_strided_slice %1 {offsets = [0, 2], sizes = [16, 1], strides = [1, 1]} : vector<16x4xf32> to vector<16x1xf32>
    %5 = vector.extract_strided_slice %1 {offsets = [0, 3], sizes = [16, 1], strides = [1, 1]} : vector<16x4xf32> to vector<16x1xf32>
    %6 = tpu.iota {dimensions = array<i32: 1>} : vector<1x128xi32>
    %c128_i32 = arith.constant 128 : i32
    %7 = arith.muli %arg1, %c128_i32 : i32
    %8 = vector.broadcast %7 : i32 to vector<1x128xi32>
    %9 = arith.addi %6, %8 : vector<1x128xi32>
    %10 = arith.sitofp %9 : vector<1x128xi32> to vector<1x128xf32>
    %cst = arith.constant 6.250000e-02 : f32
    %11 = vector.broadcast %cst : f32 to vector<1x128xf32>
    %12 = arith.mulf %10, %11 : vector<1x128xf32>
    %13 = math.floor %12 : vector<1x128xf32>
    %cst_2 = arith.constant 1.600000e+01 : f32
    %14 = vector.broadcast %cst_2 : f32 to vector<1x128xf32>
    %15 = arith.mulf %13, %14 : vector<1x128xf32>
    %16 = arith.subf %10, %15 : vector<1x128xf32>
    %cst_3 = arith.constant 1.600000e+01 : f32
    %17 = vector.broadcast %cst_3 : f32 to vector<1x128xf32>
    %18 = arith.cmpf oge, %16, %17 : vector<1x128xf32>
    %cst_4 = arith.constant 0.000000e+00 : f32
    %19 = vector.broadcast %cst_4 : f32 to vector<1x128xf32>
    %20 = arith.cmpf olt, %16, %19 : vector<1x128xf32>
    %cst_5 = arith.constant 1.000000e+00 : f32
    %21 = vector.broadcast %cst_5 : f32 to vector<1x128xf32>
    %22 = arith.addf %13, %21 : vector<1x128xf32>
    %cst_6 = arith.constant 1.000000e+00 : f32
    %23 = vector.broadcast %cst_6 : f32 to vector<1x128xf32>
    %24 = arith.subf %13, %23 : vector<1x128xf32>
    %25 = arith.select %20, %24, %13 : vector<1x128xi1>, vector<1x128xf32>
    %26 = arith.select %18, %22, %25 : vector<1x128xi1>, vector<1x128xf32>
    %cst_7 = arith.constant 1.600000e+01 : f32
    %27 = vector.broadcast %cst_7 : f32 to vector<1x128xf32>
    %28 = arith.subf %16, %27 : vector<1x128xf32>
    %cst_8 = arith.constant 1.600000e+01 : f32
    %29 = vector.broadcast %cst_8 : f32 to vector<1x128xf32>
    %30 = arith.addf %16, %29 : vector<1x128xf32>
    %31 = arith.select %20, %30, %16 : vector<1x128xi1>, vector<1x128xf32>
    %32 = arith.select %18, %28, %31 : vector<1x128xi1>, vector<1x128xf32>
    %cst_9 = arith.constant 2.000000e+00 : f32
    %33 = vector.broadcast %cst_9 : f32 to vector<1x128xf32>
    %34 = arith.mulf %33, %32 : vector<1x128xf32>
    %cst_10 = arith.constant 1.000000e+00 : f32
    %35 = vector.broadcast %cst_10 : f32 to vector<1x128xf32>
    %36 = arith.addf %34, %35 : vector<1x128xf32>
    %cst_11 = arith.constant 6.250000e-02 : f32
    %37 = vector.broadcast %cst_11 : f32 to vector<1x128xf32>
    %38 = arith.mulf %36, %37 : vector<1x128xf32>
    %cst_12 = arith.constant 1.000000e+00 : f32
    %39 = vector.broadcast %cst_12 : f32 to vector<1x128xf32>
    %40 = arith.subf %38, %39 : vector<1x128xf32>
    %cst_13 = arith.constant 5.000000e-01 : f32
    %41 = vector.broadcast %cst_13 : f32 to vector<1x128xf32>
    %42 = arith.mulf %40, %41 : vector<1x128xf32>
    %cst_14 = arith.constant 2.000000e+00 : f32
    %43 = vector.broadcast %cst_14 : f32 to vector<1x128xf32>
    %44 = arith.mulf %43, %26 : vector<1x128xf32>
    %cst_15 = arith.constant 1.000000e+00 : f32
    %45 = vector.broadcast %cst_15 : f32 to vector<1x128xf32>
    %46 = arith.addf %44, %45 : vector<1x128xf32>
    %cst_16 = arith.constant 6.250000e-02 : f32
    %47 = vector.broadcast %cst_16 : f32 to vector<1x128xf32>
    %48 = arith.mulf %46, %47 : vector<1x128xf32>
    %cst_17 = arith.constant 1.000000e+00 : f32
    %49 = vector.broadcast %cst_17 : f32 to vector<1x128xf32>
    %50 = arith.subf %48, %49 : vector<1x128xf32>
    %cst_18 = arith.constant 5.000000e-01 : f32
    %51 = vector.broadcast %cst_18 : f32 to vector<1x128xf32>
    %52 = arith.mulf %50, %51 : vector<1x128xf32>
    %53 = vector.broadcast %2 : vector<16x1xf32> to vector<16x128xf32>
    %54 = vector.broadcast %42 : vector<1x128xf32> to vector<16x128xf32>
    %55 = arith.mulf %53, %54 : vector<16x128xf32>
    %56 = vector.broadcast %3 : vector<16x1xf32> to vector<16x128xf32>
    %57 = vector.broadcast %52 : vector<1x128xf32> to vector<16x128xf32>
    %58 = arith.mulf %56, %57 : vector<16x128xf32>
    %59 = arith.addf %55, %58 : vector<16x128xf32>
    %60 = vector.broadcast %4 : vector<16x1xf32> to vector<16x128xf32>
    %61 = arith.addf %59, %60 : vector<16x128xf32>
    %62 = math.sin %61 : vector<16x128xf32>
    %63 = vector.broadcast %5 : vector<16x1xf32> to vector<16x128xf32>
    %64 = arith.mulf %62, %63 : vector<16x128xf32>
    %c0_19 = arith.constant 0 : index
    %c0_20 = arith.constant 0 : index
    %65 = vector.load %arg3[%c0_19, %c0_20] : memref<16x16xf32, #tpu.memory_space<vmem>>, vector<16x16xf32>
    %cst_21 = arith.constant dense<0.000000e+00> : vector<16x128xf32>
    %66 = tpu.matmul %65, %64, %cst_21 {dimension_numbers = #tpu.dot_dimension_numbers<[1], [0], [0], [1], [0, 0, 1, 1], [], []>} : vector<16x16xf32>, vector<16x128xf32>, vector<16x128xf32> -> vector<16x128xf32>
    %c0_22 = arith.constant 0 : index
    %c0_23 = arith.constant 0 : index
    %c0_24 = arith.constant 0 : index
    %67 = vector.load %arg4[%c0_22, %c0_23, %c0_24] : memref<1x16x128xf32, #tpu.memory_space<vmem>>, vector<1x16x128xf32>
    %68 = vector.shape_cast %67 : vector<1x16x128xf32> to vector<16x128xf32>
    %69 = vector.shape_cast %66 : vector<16x128xf32> to vector<1x16x128xf32>
    tpu.vector_store %arg4[%c0_22, %c0_23, %c0_24], %69 {strides = array<i32>} : memref<1x16x128xf32, #tpu.memory_space<vmem>>, vector<1x16x128xf32>,
    return
  }
  func.func @transform_0(%arg0: i32, %arg1: i32) -> (i32, i32, i32) {
    %c0_i32 = arith.constant 0 : i32
    %c0_i32_0 = arith.constant 0 : i32
    %c0_i32_1 = arith.constant 0 : i32
    return %arg0, %c0_i32, %c0_i32_0 : i32, i32, i32
  }
  func.func @transform_1(%arg0: i32, %arg1: i32) -> (i32, i32) {
    %c0_i32 = arith.constant 0 : i32
    %c0_i32_0 = arith.constant 0 : i32
    %c0_i32_1 = arith.constant 0 : i32
    return %c0_i32, %c0_i32_0 : i32, i32
  }
  func.func @transform_2(%arg0: i32, %arg1: i32) -> (i32, i32, i32) {
    %c0_i32 = arith.constant 0 : i32
    %c0_i32_0 = arith.constant 0 : i32
    return %arg0, %c0_i32, %arg1 : i32, i32, i32
  }
}

</mosaic_0001>

<llo_original>
// kernel: tpu_custom_call.1
$region0: #{tpu_custom_call.1}
  #allocation0 [shape = 'u32[]', space=smem, size = 0x4, offset = 0x4, fixed_abs, tag = 'smem constant byte address 0x4 - core index']
  #allocation1 [shape = 'u32[144,128]{1,0:T(1,128)}', space=vmem, size = 0x12000, scoped, tag = 'internal scratch']
  %s0 = inlined_call_operand.vmem [shape: f32[2,16,4], index: 0, kind: input, shape index: {}]
  %s1 = inlined_call_operand.vmem [shape: f32[16,16], index: 1, kind: input, shape index: {}]
  %s2 = inlined_call_operand.hbm [shape: f32[2,16,256], index: 2, kind: output, shape index: {}]
  %s3 = sld [smem:[#allocation0]]
  $region41: #{tpu_custom_call.1} parent=0
    _
  %s5 = ssub.s32 1, %s3
  %s6 = scalar_select 0, %s5, %s3
  $region1: #{tpu_custom_call.1} parent=0
    #allocation2 [shape = 'u8[16384]{0}', space=vmem, size = 0x4000, scoped, tag = 'output window, operand 0']
    #allocation3 [shape = 's32[2]{0}', space=sflag, size = 0x8, scoped, tag = 'scoped memory for tpu_custom_call.1']
    %7 = vsyncpa [#allocation3], 0
    %s8 = scalar_lea.sflag [#allocation3], 1
    %9 = vsyncpa %s8, 0
    loop: start=0, step=1, limit=6
    $region2: #{tpu_custom_call.1} parent=1 // loop_pre_header
      _
    $region3: #{tpu_custom_call.1} parent=1 // loop_header
      %s11 = sphi 0, %s15
      %p12 = scmp.ge.s32.totalorder %s11, 6
      %s18 = sphi 0, %s30
      %s19 = sphi 0, %s26
      %s20 = sphi 0, %s18
      %s21 = sphi 0, %s19
      %s22 = sphi 0, %s20
      %s23 = sphi 0, %s21
      %s33 = sphi 0, %s35
      %s36 = sphi 0, %s33
      %s37 = sphi 0, %s36
      %s53 = sphi 0, %s37
      %s57 = sphi 0, %s57
      %s59 = sphi 0, %s57
      %s60 = sphi 0, %s59
      %s74 = sphi 0, %s60
      %s82 = sphi 0, %s84
      %s85 = sphi 0, %s82
      %s86 = sphi 0, %s85
      %s102 = sphi 0, %s86
    $region4: #{tpu_custom_call.1} parent=1 // loop_header_branch
      %14 = sbr.rel (%p12) target = $region8
    $region5: #{tpu_custom_call.1} parent=1 // loop_body
      %s16 = ssub.s32 %s11, 1
      %s17 = ssub.s32 %s11, 2
      %s24 = sadd.s32 1, %s19
      %p25 = scmp.ge.s32.totalorder %s24, 2
      %s26 = scalar_select %p25, 0, %s24
      %s27 = sadd.s32 1, %s18
      %s28 = scalar_select %p25, %s27, %s18
      %p29 = scmp.ge.s32.totalorder %s28, 2
      %s30 = scalar_select %p29, 0, %s28
      %s31 = ssub.s32 %s18, %s30
      %p32 = scmp.eq.s32.totalorder %s31, 0
      %s34 = sadd.s32 %s33, 1
      %s35 = scalar_select %p32, %s33, %s34
      %p38 = pneg %p32
      %p39 = scmp.eq.s32.totalorder %s11, 3
      %p40 = por %p38, %p39
      %p41 = scmp.ne.s32.totalorder %s33, %s36
      %p42 = scmp.eq.s32.totalorder %s11, 0
      %p43 = por %p41, %p42
      %p44 = scmp.ne.s32.totalorder %s33, %s36
      %p45 = scmp.eq.s32.totalorder %s16, 3
      %p46 = por %p44, %p45
      %p47 = scmp.ne.s32.totalorder %s36, %s37
      %p48 = scmp.eq.s32.totalorder %s16, 0
      %p49 = por %p47, %p48
      %p50 = scmp.ne.s32.totalorder %s36, %s37
      %p51 = scmp.eq.s32.totalorder %s17, 3
      %p52 = por %p50, %p51
      %p54 = scmp.ne.s32.totalorder %s37, %s53
      %p55 = scmp.eq.s32.totalorder %s17, 0
      %p56 = por %p54, %p55
      %s58 = sadd.s32 %s57, 1
      %p61 = scmp.eq.s32.totalorder %s11, 3
      %p62 = scmp.ne.s32.totalorder %s57, %s59
      %p63 = scmp.eq.s32.totalorder %s11, 0
      %p64 = por %p62, %p63
      %p65 = scmp.ne.s32.totalorder %s57, %s59
      %p66 = scmp.eq.s32.totalorder %s16, 3
      %p67 = por %p65, %p66
      %p68 = scmp.ne.s32.totalorder %s59, %s60
      %p69 = scmp.eq.s32.totalorder %s16, 0
      %p70 = por %p68, %p69
      %p71 = scmp.ne.s32.totalorder %s59, %s60
      %p72 = scmp.eq.s32.totalorder %s17, 3
      %p73 = por %p71, %p72
      %p75 = scmp.ne.s32.totalorder %s60, %s74
      %p76 = scmp.eq.s32.totalorder %s17, 0
      %p77 = por %p75, %p76
      %s78 = ssub.s32 %s18, %s30
      %s79 = ssub.s32 %s19, %s26
      %s80 = sor.u32 %s78, %s79
      %p81 = scmp.eq.s32.totalorder %s80, 0
      %s83 = sadd.s32 %s82, 1
      %s84 = scalar_select %p81, %s82, %s83
      %p87 = pneg %p81
      %p88 = scmp.eq.s32.totalorder %s11, 3
      %p89 = por %p87, %p88
      %p90 = scmp.ne.s32.totalorder %s82, %s85
      %p91 = scmp.eq.s32.totalorder %s11, 0
      %p92 = por %p90, %p91
      %p93 = scmp.ne.s32.totalorder %s82, %s85
      %p94 = scmp.eq.s32.totalorder %s16, 3
      %p95 = por %p93, %p94
      %p96 = scmp.ne.s32.totalorder %s85, %s86
      %p97 = scmp.eq.s32.totalorder %s16, 0
      %p98 = por %p96, %p97
      %p99 = scmp.ne.s32.totalorder %s85, %s86
      %p100 = scmp.eq.s32.totalorder %s17, 3
      %p101 = por %p99, %p100
      %p103 = scmp.ne.s32.totalorder %s86, %s102
      %p104 = scmp.eq.s32.totalorder %s17, 0
      %p105 = por %p103, %p104
      %p106 = scmp.le.s32.totalorder 1, %s11
      %p107 = scmp.lt.s32.totalorder %s11, 5
      %p108 = pnand %p106, %p107
      %p109 = pneg %p108
      // Predicated region
      $region9: #{tpu_custom_call.1} parent=5 // pred_check
        _
      $region10: #{tpu_custom_call.1} parent=5 // pred_check_branch
        %111 = sbr.rel (%p108) target = $region12
      $region11: #{tpu_custom_call.1} parent=5 // pred_region
        %s112 = ssub.s32 %s11, 1
        // Predicated region
        $region13: #{tpu_custom_call.1} parent=11 // pred_check
          %p113 = pneg %p70
        $region14: #{tpu_custom_call.1} parent=11 // pred_check_branch
          %115 = sbr.rel (%p113) target = $region16
        $region15: #{tpu_custom_call.1} parent=11 // pred_region
          _
        $region16: #{tpu_custom_call.1} parent=11 // pred_fallthru
          _
      $region12: #{tpu_custom_call.1} parent=5 // pred_fallthru
        _
      %p116 = scmp.lt.s32.totalorder %s11, 4
      // Predicated region
      $region17: #{tpu_custom_call.1} parent=5 // pred_check
        %p117 = pneg %p116
      $region18: #{tpu_custom_call.1} parent=5 // pred_check_branch
        %119 = sbr.rel (%p117) target = $region20
      $region19: #{tpu_custom_call.1} parent=5 // pred_region
        // Predicated region
        $region21: #{tpu_custom_call.1} parent=19 // pred_check
          %p120 = pneg %p43
        $region22: #{tpu_custom_call.1} parent=19 // pred_check_branch
          %122 = sbr.rel (%p120) target = $region24
        $region23: #{tpu_custom_call.1} parent=19 // pred_region
          %p123 = scmp.lt.s32.totalorder %s18, 1
          %s124 = scalar_select %p123, %s18, 1
          %s125 = smul.addr %s124, 2
          %s126 = smul.addr %s125, 8
          %s127 = scalar_lea.vmem %s0, %s126
        $region24: #{tpu_custom_call.1} parent=19 // pred_fallthru
          _
      $region20: #{tpu_custom_call.1} parent=5 // pred_fallthru
        _
      %p128 = scmp.le.s32.totalorder 1, %s11
      %p129 = scmp.lt.s32.totalorder %s11, 5
      %p130 = pnand %p128, %p129
      %p131 = pneg %p130
      // Predicated region
      $region25: #{tpu_custom_call.1} parent=5 // pred_check
        _
      $region26: #{tpu_custom_call.1} parent=5 // pred_check_branch
        %133 = sbr.rel (%p130) target = $region28
      $region27: #{tpu_custom_call.1} parent=5 // pred_region
        %s134 = ssub.s32 %s11, 1
        %p135 = scmp.lt.s32.totalorder %s20, 1
        %s136 = scalar_select %p135, %s20, 1
        %s137 = smul.addr %s136, 2
        %s138 = smul.addr %s137, 8
        %s139 = scalar_lea.vmem %s0, %s138
        %p140 = pneg %p49
        %p141 = pneg %p46
        %p142 = pneg %p70
        %p143 = pneg %p67
        %p144 = pneg %p98
        %p145 = pneg %p95
        %s146 = sand.u32 %s85, 1
        %s147 = scalar_lea.sflag [#allocation3], %s146
        %s148 = sand.u32 %s85, 1
        %s149 = smul.addr %s148, 16
        %s150 = scalar_lea.vmem [#allocation2], %s149
        %p151 = scmp.lt.s32.totalorder %s20, 1
        %s152 = scalar_select %p151, %s20, 1
        %s153 = smul.addr %s152, 2
        %s154 = smul.addr %s153, 8
        %s155 = scalar_lea.vmem %s0, %s154
        %v156 = vld [vmem:[%s155] sm:$0xff]
        %v157 = vld [vmem:[%s155 + $0x8] sm:$0xff]
        %v158 = vlaneseq
        %v159 = vand.u32 %v158, 127
        %s160 = smul.u32 %s21, 128
        %v161 = vstv %s160
        %v162 = vadd.s32 %v159, %v161
        %v163 = vcvt.s32.f32 %v162
        %v164 = vmul.f32 %v163, 0.0625
        %v165 = vfloor.f32 %v164
        %v166 = vmul.f32 %v165, 16.0
        %v167 = vsub.f32 %v163, %v166
        %vm168 = vcmp.ge.f32.partialorder %v167, 16.0
        %vm169 = vcmp.lt.f32.partialorder %v167, 0.0
        %v170 = vadd.f32 %v165, 1.0
        %v171 = vsub.f32 %v165, 1.0
        %v172 = vsel %vm169, %v171, %v165
        %v173 = vsel %vm168, %v170, %v172
        %v174 = vsub.f32 %v167, 16.0
        %v175 = vadd.f32 %v167, 16.0
        %v176 = vsel %vm169, %v175, %v167
        %v177 = vsel %vm168, %v174, %v176
        %v178 = vmul.f32 %v177, 2.0
        %v179 = vadd.f32 %v178, 1.0
        %v180 = vmul.f32 %v179, 0.0625
        %v181 = vsub.f32 %v180, 1.0
        %v182 = vmul.f32 %v181, 0.5
        %v183 = vmul.f32 %v173, 2.0
        %v184 = vadd.f32 %v183, 1.0
        %v185 = vmul.f32 %v184, 0.0625
        %v186 = vsub.f32 %v185, 1.0
        %v187 = vmul.f32 %v186, 0.5
        %189 = vset.pattern.permute.xlu0 0
        %190 = vperm.xlu0 %189, %v156
        %v191 = vpop.permute.xlu0 %190
        %194 = vset.pattern.permute.xlu0 0
        %195 = vperm.xlu0 %194, %v157
        %v196 = vpop.permute.xlu0 %195
        %v198 = vmul.f32 %v191, %v182
        %v199 = vmul.f32 %v196, %v182
        %200 = vset.pattern.permute.xlu0 1
        %201 = vperm.xlu0 %200, %v156
        %v202 = vpop.permute.xlu0 %201
        %204 = vset.pattern.permute.xlu0 1
        %205 = vperm.xlu0 %204, %v157
        %v206 = vpop.permute.xlu0 %205
        %v208 = vmul.f32 %v202, %v187
        %v209 = vmul.f32 %v206, %v187
        %v210 = vadd.f32 %v198, %v208
        %v211 = vadd.f32 %v199, %v209
        %212 = vset.pattern.permute.xlu0 2
        %213 = vperm.xlu0 %212, %v156
        %v214 = vpop.permute.xlu0 %213
        %216 = vset.pattern.permute.xlu0 2
        %217 = vperm.xlu0 %216, %v157
        %v218 = vpop.permute.xlu0 %217
        %v220 = vadd.f32 %v210, %v214
        %v221 = vadd.f32 %v211, %v218
        %v222 = vand.u32 2147483647, %v220
        %vm223 = vcmp.le.f32.partialorder %v222, 0.7853982
        %vm224 = vcmp.lt.s32.totalorder %v220, 0
        %v225 = vand.u32 %v220, 2139095040
        %v226 = vshrl.u32 %v225, 23
        %v227 = vsub.s32 %v226, 127
        %v228 = vand.u32 2147483647, %v220
        %v229 = vand.u32 %v228, 8388607
        %v230 = vor.u32 %v229, 8388608
        %v231 = vsub.s32 0, %v230
        %v232 = vadd.s32 %v227, 1
        %vm233 = vcmp.gt.s32.totalorder %v232, 0
        %v234 = vsel %vm233, %v232, 0
        %v235 = vshrl.u32 %v234, 5
        %v236 = vand.u32 %v234, 31
        %v237 = vsub.s32 32, %v236
        %v238 = vshrl.u32 683565275, %v237
        %v239 = vshll.u32 683565275, %v236
        %v240 = vshrl.u32 2475754826, %v237
        %v241 = vor.u32 %v239, %v240
        %v242 = vshll.u32 2475754826, %v236
        %v243 = vshrl.u32 2131351028, %v237
        %v244 = vor.u32 %v242, %v243
        %v245 = vshll.u32 2131351028, %v236
        %v246 = vshrl.u32 2102212464, %v237
        %v247 = vor.u32 %v245, %v246
        %v248 = vshll.u32 2102212464, %v236
        %v249 = vshrl.u32 920167782, %v237
        %v250 = vor.u32 %v248, %v249
        %v251 = vshll.u32 920167782, %v236
        %v252 = vshrl.u32 1326507024, %v237
        %v253 = vor.u32 %v251, %v252
        %vm254 = vcmp.lt.s32.totalorder %v235, 1
        %vm255 = vcmp.lt.s32.totalorder %v235, 2
        %vm256 = vcmp.lt.s32.totalorder %v235, 3
        %vm257 = vcmp.lt.s32.totalorder %v235, 4
        %v258 = vsel %vm254, %v238, %v241
        %v259 = vsel %vm257, %v247, 2102212464
        %v260 = vsel %vm256, %v244, %v259
        %v261 = vsel %vm255, %v258, %v260
        %v262 = vsel %vm254, %v241, %v244
        %v263 = vsel %vm257, %v250, 920167782
        %v264 = vsel %vm256, %v247, %v263
        %v265 = vsel %vm255, %v262, %v264
        %v266 = vsel %vm254, %v244, %v247
        %v267 = vsel %vm257, %v253, 1326507024
        %v268 = vsel %vm256, %v250, %v267
        %v269 = vsel %vm255, %v266, %v268
        %v270 = vshll.u32 %v230, 8
        %v271 = vmul.u32.u64.compose %v270, %v269
        %v272 = vextract.low.u32 %v271
        %v273 = vextract.high.u32 %v271
        %v274 = vmul.u32.u64.compose %v270, %v265
        %v275 = vextract.low.u32 %v274
        %v276 = vextract.high.u32 %v274
        %v277 = vmul.u32 %v270, %v261
        %v278 = vadd.s32 %v273, %v275
        %vm279 = vc.u32 %v273, %v275
        %v280 = vadd.s32 %v276, 1
        %v281 = vsel %vm279, %v280, %v276
        %v282 = vadd.s32 %v277, %v281
        %v283 = vadd.s32 %v282, 536870912
        %v284 = vshrl.u32 %v283, 30
        %v285 = vshll.u32 %v284, 30
        %v286 = vsub.s32 %v282, %v285
        %vm287 = vcmp.lt.s32.totalorder %v286, 0
        %v288 = vsub.s32 0, %v286
        %v289 = vsel %vm287, %v288, %v286
        %v290 = vclz %v289
        %v291 = vsub.s32 %v290, 2
        %vm292 = vcmp.gt.s32.totalorder 0, %v291
        %v293 = vsel %vm292, 0, %v291
        %v294 = vsub.s32 32, %v293
        %v295 = vshll.u32 %v286, %v293
        %v296 = vshrl.u32 %v278, %v294
        %v297 = vor.u32 %v295, %v296
        %v298 = vsub.s32 4294967266, %v293
        %v299 = vadd.s32 %v298, 127
        %v300 = vshll.u32 %v299, 23
        %v301 = vor.u32 4788187, %v300
        %v302 = vand.u32 2147483647, %v301
        %v304 = vcvt.s32.f32 %v297
        %v305 = vmul.f32 %v304, %v302
        %v306 = vxor.u32 %v305, 2147483648
        %v307 = vsel %vm224, %v306, %v305
        %v308 = vsub.s32 4, %v284
        %v309 = vsel %vm224, %v308, %v284
        %v310 = vsel %vm223, %v220, %v307
        %v311 = vsel %vm223, 0, %v309
        %v312 = vcosq.f32.pop %v310
        %v313 = vsinq.f32.pop %v310
        %vm314 = vweird.f32 %v220
        %v315 = vadd.s32 %v311, 3
        %v316 = vand.u32 %v315, 3
        %vm317 = vcmp.lt.s32.totalorder %v316, 2
        %vm318 = vcmp.eq.s32.totalorder %v316, 0
        %v319 = vxor.u32 %v313, 2147483648
        %v320 = vsel %vm318, %v312, %v319
        %vm321 = vcmp.eq.s32.totalorder %v316, 2
        %v322 = vxor.u32 %v312, 2147483648
        %v323 = vsel %vm321, %v322, %v313
        %v324 = vsel %vm317, %v320, %v323
        %v325 = vsel %vm314, nan, %v324
        %v326 = vand.u32 2147483647, %v221
        %vm327 = vcmp.le.f32.partialorder %v326, 0.7853982
        %vm328 = vcmp.lt.s32.totalorder %v221, 0
        %v329 = vand.u32 %v221, 2139095040
        %v330 = vshrl.u32 %v329, 23
        %v331 = vsub.s32 %v330, 127
        %v332 = vand.u32 2147483647, %v221
        %v333 = vand.u32 %v332, 8388607
        %v334 = vor.u32 %v333, 8388608
        %v335 = vsub.s32 0, %v334
        %v336 = vadd.s32 %v331, 1
        %vm337 = vcmp.gt.s32.totalorder %v336, 0
        %v338 = vsel %vm337, %v336, 0
        %v339 = vshrl.u32 %v338, 5
        %v340 = vand.u32 %v338, 31
        %v341 = vsub.s32 32, %v340
        %v342 = vshrl.u32 683565275, %v341
        %v343 = vshll.u32 683565275, %v340
        %v344 = vshrl.u32 2475754826, %v341
        %v345 = vor.u32 %v343, %v344
        %v346 = vshll.u32 2475754826, %v340
        %v347 = vshrl.u32 2131351028, %v341
        %v348 = vor.u32 %v346, %v347
        %v349 = vshll.u32 2131351028, %v340
        %v350 = vshrl.u32 2102212464, %v341
        %v351 = vor.u32 %v349, %v350
        %v352 = vshll.u32 2102212464, %v340
        %v353 = vshrl.u32 920167782, %v341
        %v354 = vor.u32 %v352, %v353
        %v355 = vshll.u32 920167782, %v340
        %v356 = vshrl.u32 1326507024, %v341
        %v357 = vor.u32 %v355, %v356
        %vm358 = vcmp.lt.s32.totalorder %v339, 1
        %vm359 = vcmp.lt.s32.totalorder %v339, 2
        %vm360 = vcmp.lt.s32.totalorder %v339, 3
        %vm361 = vcmp.lt.s32.totalorder %v339, 4
        %v362 = vsel %vm358, %v342, %v345
        %v363 = vsel %vm361, %v351, 2102212464
        %v364 = vsel %vm360, %v348, %v363
        %v365 = vsel %vm359, %v362, %v364
        %v366 = vsel %vm358, %v345, %v348
        %v367 = vsel %vm361, %v354, 920167782
        %v368 = vsel %vm360, %v351, %v367
        %v369 = vsel %vm359, %v366, %v368
        %v370 = vsel %vm358, %v348, %v351
        %v371 = vsel %vm361, %v357, 1326507024
        %v372 = vsel %vm360, %v354, %v371
        %v373 = vsel %vm359, %v370, %v372
        %v374 = vshll.u32 %v334, 8
        %v375 = vmul.u32.u64.compose %v374, %v373
        %v376 = vextract.low.u32 %v375
        %v377 = vextract.high.u32 %v375
        %v378 = vmul.u32.u64.compose %v374, %v369
        %v379 = vextract.low.u32 %v378
        %v380 = vextract.high.u32 %v378
        %v381 = vmul.u32 %v374, %v365
        %v382 = vadd.s32 %v377, %v379
        %vm383 = vc.u32 %v377, %v379
        %v384 = vadd.s32 %v380, 1
        %v385 = vsel %vm383, %v384, %v380
        %v386 = vadd.s32 %v381, %v385
        %v387 = vadd.s32 %v386, 536870912
        %v388 = vshrl.u32 %v387, 30
        %v389 = vshll.u32 %v388, 30
        %v390 = vsub.s32 %v386, %v389
        %vm391 = vcmp.lt.s32.totalorder %v390, 0
        %v392 = vsub.s32 0, %v390
        %v393 = vsel %vm391, %v392, %v390
        %v394 = vclz %v393
        %v395 = vsub.s32 %v394, 2
        %vm396 = vcmp.gt.s32.totalorder 0, %v395
        %v397 = vsel %vm396, 0, %v395
        %v398 = vsub.s32 32, %v397
        %v399 = vshll.u32 %v390, %v397
        %v400 = vshrl.u32 %v382, %v398
        %v401 = vor.u32 %v399, %v400
        %v402 = vsub.s32 4294967266, %v397
        %v403 = vadd.s32 %v402, 127
        %v404 = vshll.u32 %v403, 23
        %v405 = vor.u32 4788187, %v404
        %v406 = vand.u32 2147483647, %v405
        %v408 = vcvt.s32.f32 %v401
        %v409 = vmul.f32 %v408, %v406
        %v410 = vxor.u32 %v409, 2147483648
        %v411 = vsel %vm328, %v410, %v409
        %v412 = vsub.s32 4, %v388
        %v413 = vsel %vm328, %v412, %v388
        %v414 = vsel %vm327, %v221, %v411
        %v415 = vsel %vm327, 0, %v413
        %v416 = vcosq.f32.pop %v414
        %v417 = vsinq.f32.pop %v414
        %vm418 = vweird.f32 %v221
        %v419 = vadd.s32 %v415, 3
        %v420 = vand.u32 %v419, 3
        %vm421 = vcmp.lt.s32.totalorder %v420, 2
        %vm422 = vcmp.eq.s32.totalorder %v420, 0
        %v423 = vxor.u32 %v417, 2147483648
        %v424 = vsel %vm422, %v416, %v423
        %vm425 = vcmp.eq.s32.totalorder %v420, 2
        %v426 = vxor.u32 %v416, 2147483648
        %v427 = vsel %vm425, %v426, %v417
        %v428 = vsel %vm421, %v424, %v427
        %v429 = vsel %vm418, nan, %v428
        %430 = vset.pattern.permute.xlu0 3
        %431 = vperm.xlu0 %430, %v156
        %v432 = vpop.permute.xlu0 %431
        %434 = vset.pattern.permute.xlu0 3
        %435 = vperm.xlu0 %434, %v157
        %v436 = vpop.permute.xlu0 %435
        %v438 = vmul.f32 %v325, %v432
        %v439 = vmul.f32 %v429, %v436
        %v440 = vld [vmem:[%s1] sm:$0xff]
        %v441 = vld [vmem:[%s1 + $0x8] sm:$0xff]
        %vm442 = vcmask 130048
        %v444 = vsel %vm442, %v440, 0
        %v447 = vsel %vm442, %v441, 0
        %449 = vmatprep.subr.mxu0 0.0
        %450 = vmatpush1.msra.mxu0 %v438
        %451 = vmatprep.subr.mxu0 0.0
        %452 = vmatpush1.msra.mxu0 %v439
        %453 = vmatprep.subr.mxu0 0.0
        %454 = vmatpush1.msra.mxu0 0.0
        %455 = vmatprep.subr.mxu0 0.0
        %456 = vmatpush1.msra.mxu0 0.0
        %457 = vmatprep.subr.mxu0 0.0
        %458 = vmatpush1.msra.mxu0 0.0
        %459 = vmatprep.subr.mxu0 0.0
        %460 = vmatpush1.msra.mxu0 0.0
        %461 = vmatprep.subr.mxu0 0.0
        %462 = vmatpush1.msra.mxu0 0.0
        %463 = vmatprep.subr.mxu0 0.0
        %464 = vmatpush1.msra.mxu0 0.0
        %465 = vmatprep.subr.mxu0 0.0
        %466 = vmatpush1.msra.mxu0 0.0
        %467 = vmatprep.subr.mxu0 0.0
        %468 = vmatpush1.msra.mxu0 0.0
        %469 = vmatprep.subr.mxu0 0.0
        %470 = vmatpush1.msra.mxu0 0.0
        %471 = vmatprep.subr.mxu0 0.0
        %472 = vmatpush1.msra.mxu0 0.0
        %473 = vmatprep.subr.mxu0 0.0
        %474 = vmatpush1.msra.mxu0 0.0
        %475 = vmatprep.subr.mxu0 0.0
        %476 = vmatpush1.msra.mxu0 0.0
        %477 = vmatprep.subr.mxu0 0.0
        %478 = vmatpush1.msra.mxu0 0.0
        %479 = vmatprep.subr.mxu0 0.0
        %480 = vmatpush1.msra.mxu0 0.0
        %481 = vmatprep.subr.mxu0 0.0
        %482 = vmatpush1.msra.mxu0 0.0
        %483 = vmatprep.subr.mxu0 0.0
        %484 = vmatpush1.msra.mxu0 0.0
        %485 = vmatprep.subr.mxu0 0.0
        %486 = vmatpush1.msra.mxu0 0.0
        %487 = vmatprep.subr.mxu0 0.0
        %488 = vmatpush1.msra.mxu0 0.0
        %489 = vmatprep.subr.mxu0 0.0
        %490 = vmatpush1.msra.mxu0 0.0
        %491 = vmatprep.subr.mxu0 0.0
        %492 = vmatpush1.msra.mxu0 0.0
        %493 = vmatprep.subr.mxu0 0.0
        %494 = vmatpush1.msra.mxu0 0.0
        %495 = vmatprep.subr.mxu0 0.0
        %496 = vmatpush1.msra.mxu0 0.0
        %497 = vmatprep.subr.mxu0 0.0
        %498 = vmatpush1.msra.mxu0 0.0
        %499 = vmatprep.subr.mxu0 0.0
        %500 = vmatpush1.msra.mxu0 0.0
        %501 = vmatprep.subr.mxu0 0.0
        %502 = vmatpush1.msra.mxu0 0.0
        %503 = vmatprep.subr.mxu0 0.0
        %504 = vmatpush1.msra.mxu0 0.0
        %505 = vmatprep.subr.mxu0 0.0
        %506 = vmatpush1.msra.mxu0 0.0
        %507 = vmatprep.subr.mxu0 0.0
        %508 = vmatpush1.msra.mxu0 0.0
        %509 = vmatprep.subr.mxu0 0.0
        %510 = vmatpush1.msra.mxu0 0.0
        %511 = vmatprep.subr.mxu0 0.0
        %512 = vmatpush1.msra.mxu0 0.0
        %513 = vmatprep.mubr.f32.mxu0 0.0
        %514 = vmatmul.mubr.f32.gmra.mrb[0].mxu0 %v444
        %v515 = vpop.f32.mrb[0].mxu0
        %v516 = vadd.f32 0.0, %v515
        %v517 = vpop.f32.mrb[0].mxu0
        %518 = vmatprep.mubr.f32.mxu0 0.0
        %519 = vmatmul.mubr.f32.gmra.mrb[0].mxu0 %v447
        %v520 = vpop.f32.mrb[0].mxu0
        %v521 = vadd.f32 0.0, %v520
        %v522 = vpop.f32.mrb[0].mxu0
        %523 = vdwg.mxu0
        %524 = vst [vmem:[%s150] sm:$0xff] %v516
        %525 = vst [vmem:[%s150 + $0x8] sm:$0xff] %v521
        %s526 = sand.u32 %s85, 1
        %s527 = scalar_lea.sflag [#allocation3], %s526
        %s528 = sand.u32 %s85, 1
        %s529 = smul.addr %s528, 16
        %s530 = scalar_lea.vmem [#allocation2], %s529
        // Predicated region
        $region29: #{tpu_custom_call.1} parent=27 // pred_check
          %p531 = pneg %p95
        $region30: #{tpu_custom_call.1} parent=27 // pred_check_branch
          %533 = sbr.rel (%p531) target = $region32
        $region31: #{tpu_custom_call.1} parent=27 // pred_region
          %s535 = ssub.s32 256, 256
          %536 = vsyncadd %s527, %s535
          %s537 = smul.addr %s20, 4
          %s538 = sadd.s32 %s21, %s537
          %s539 = smul.addr %s538, 128
          %s540 = scalar_lea.hbm %s2, %s539
          %s541 = sshll.u32 %s530, 4
          %s542 = int_to_ptr.vmem [resolvable:$true] %s541
          %547 = dma.vmem_to_hbm [thread:$0]  %s542, 256, %s540, %s527, 128, 256, 8
        $region32: #{tpu_custom_call.1} parent=27 // pred_fallthru
          _
      $region28: #{tpu_custom_call.1} parent=5 // pred_fallthru
        _
      %p548 = scmp.le.s32.totalorder 2, %s11
      // Predicated region
      $region33: #{tpu_custom_call.1} parent=5 // pred_check
        %p549 = pneg %p548
      $region34: #{tpu_custom_call.1} parent=5 // pred_check_branch
        %551 = sbr.rel (%p549) target = $region36
      $region35: #{tpu_custom_call.1} parent=5 // pred_region
        %s552 = ssub.s32 %s11, 2
        // Predicated region
        $region37: #{tpu_custom_call.1} parent=35 // pred_check
          %p553 = pneg %p101
        $region38: #{tpu_custom_call.1} parent=35 // pred_check_branch
          %555 = sbr.rel (%p553) target = $region40
        $region39: #{tpu_custom_call.1} parent=35 // pred_region
          %s556 = sand.u32 %s86, 1
          %s557 = scalar_lea.sflag [#allocation3], %s556
          %s558 = sand.u32 %s86, 1
          %s559 = smul.addr %s558, 16
          %s560 = scalar_lea.vmem [#allocation2], %s559
          %561 = dma.done %s557, 256
        $region40: #{tpu_custom_call.1} parent=35 // pred_fallthru
          _
      $region36: #{tpu_custom_call.1} parent=5 // pred_fallthru
        _
    $region6: #{tpu_custom_call.1} parent=1 // loop_footer
      %s15 = sadd.s32 1, %s11
    $region7: #{tpu_custom_call.1} parent=1 // loop_footer_branch
      %10 = sbr.rel target = $region3
    $region8: #{tpu_custom_call.1} parent=1 // loop_exit
      _
    %562 = vsyncpa [#allocation3], 1
    %s563 = scalar_lea.sflag [#allocation3], 1
    %564 = vsyncpa %s563, 1

</llo_original>
